<compile_context>
chip_gen: v5e
topology: v5e:2x2
jax: 0.10.0
libtpu: 0.0.40
codegen_flags: <defaults>
</compile_context>

<pallas_src>
import jax
import jax.numpy as jnp
from jax.experimental import pallas as pl
from jax.experimental.pallas import tpu as pltpu

_LANES = 128        # lane-dense last dim: one full vreg wide, unmasked stores
_SUBLANES = 8       # (8, 128) block-tiling rule for f32
_SMALL_N = 64 * 1024  # elements; below this a fused XLA elementwise wins


def _round_up(x, m):
    return ((x + m - 1) // m) * m


def _vmem_capacity_bytes():
    """Chip VMEM size, with a conservative (v7x per-TC) fallback."""
    try:
        return int(pltpu.get_tpu_info().vmem_capacity_bytes)
    except Exception:
        return 64 * 1024 * 1024


def _pick_tile_rows(rows_padded):
    """Rows per tile: big tiles to amortize per-step overhead, capped so that
    4 streams (2 in + 2 out), double-buffered, stay well under scoped VMEM,
    and >= 2 row tiles when possible so v7x's 2 TCs both get work."""
    vmem = _vmem_capacity_bytes()
    budget = min(vmem // 4, 16 * 1024 * 1024)          # bytes of tiles in flight
    per_stream = budget // (4 * 2)                     # 4 streams, double-buffered
    max_rows = max(_SUBLANES,
                   (per_stream // (_LANES * 4)) // _SUBLANES * _SUBLANES)
    half = _round_up(pl.cdiv(rows_padded, 2), _SUBLANES)
    return int(min(max_rows, half))


def _wml_kernel(params_ref, x0_ref, x1_ref, o0_ref, o1_ref):
    """params_ref: SMEM f32[4] = (w0, exp(-2*w0), w1, exp(-2*w1)).
    x*_ref / o*_ref: (tile_rows, 128) VMEM tiles."""
    w0, s0 = params_ref[0], params_ref[1]
    w1, s1 = params_ref[2], params_ref[3]
    o0_ref[...] = (x0_ref[...].astype(jnp.float32) * s0 + w0).astype(o0_ref.dtype)
    o1_ref[...] = (x1_ref[...].astype(jnp.float32) * s1 + w1).astype(o1_ref.dtype)


def _pallas_pair(x0, x1, params, out_dtype, interpret):
    orig_shape = x0.shape
    n = x0.size
    rows = pl.cdiv(n, _LANES)
    rows_p = _round_up(rows, _SUBLANES)
    n_p = rows_p * _LANES

    def to_slab(x):
        x = x.reshape(-1)
        if n_p != n:                      # ragged tail only; aligned case is a free view
            x = jnp.pad(x, (0, n_p - n))
        return x.reshape(rows_p, _LANES)

    x0s, x1s = to_slab(x0), to_slab(x1)

    tile_rows = _pick_tile_rows(rows_p)
    grid = (pl.cdiv(rows_p, tile_rows),)  # boundary block handled by Pallas
    block = (tile_rows, _LANES)
    spec = pl.BlockSpec(block, lambda i, params: (i, 0))

    in_bytes = n_p * (x0.dtype.itemsize + x1.dtype.itemsize)
    out_bytes = 2 * n_p * jnp.dtype(out_dtype).itemsize
    cost = pl.CostEstimate(flops=4 * n_p, transcendentals=0,
                           bytes_accessed=in_bytes + out_bytes)

    o0, o1 = pl.pallas_call(
        _wml_kernel,
        out_shape=(jax.ShapeDtypeStruct((rows_p, _LANES), out_dtype),
                   jax.ShapeDtypeStruct((rows_p, _LANES), out_dtype)),
        grid_spec=pltpu.PrefetchScalarGridSpec(
            num_scalar_prefetch=1,
            grid=grid,
            in_specs=[spec, spec],
            out_specs=(spec, spec),
        ),
        compiler_params=pltpu.CompilerParams(
            dimension_semantics=("parallel",),
            vmem_limit_bytes=32 * 1024 * 1024,
        ),
        cost_estimate=cost,
        interpret=interpret,
    )(params, x0s, x1s)

    def from_slab(o):
        if n_p != n:
            o = o.reshape(-1)[:n]
        return o.reshape(orig_shape)

    return from_slab(o0), from_slab(o1)


def weighted_multi_loss(x0, x1, weight0, weight1, *,
                        force_pallas=False, interpret=False):
    """JAX/Pallas equivalent of WeightedMultiLoss.forward([x0, x1])."""
    x0 = jnp.asarray(x0)
    x1 = jnp.asarray(x1)
    w0 = jnp.asarray(weight0, jnp.float32).reshape(())
    w1 = jnp.asarray(weight1, jnp.float32).reshape(())
    # x / exp(2w) == x * exp(-2w): scalar transcendental hoisted out of the
    # per-element path (<= 1 ulp difference vs the divide form).
    s0 = jnp.exp(-2.0 * w0)
    s1 = jnp.exp(-2.0 * w1)

    # PyTorch promotion with a float32 Parameter -> at least float32 output.
    out_dt0 = jnp.promote_types(x0.dtype, jnp.float32)
    out_dt1 = jnp.promote_types(x1.dtype, jnp.float32)

    use_pallas = (x0.shape == x1.shape
                  and out_dt0 == out_dt1
                  and (force_pallas or x0.size >= _SMALL_N))
    if not use_pallas:
        # Typical case: tiny (often scalar) loss tensors, or mismatched shapes.
        # A fused XLA elementwise beats the pallas_call launch overhead here.
        l0 = (x0.astype(out_dt0) * s0 + w0).astype(out_dt0)
        l1 = (x1.astype(out_dt1) * s1 + w1).astype(out_dt1)
        return [l0, l1]

    params = jnp.stack([w0, s0, w1, s1])   # f32[4] -> SMEM via scalar prefetch
    l0, l1 = _pallas_pair(x0, x1, params, out_dt0, interpret)
    return [l0, l1]


def _reference(x0, x1, w0, w1):
    return [x0 / jnp.exp(2.0 * w0) + w0, x1 / jnp.exp(2.0 * w1) + w1]


if __name__ == "__main__":
    key = jax.random.PRNGKey(0)
    k0, k1, k2, k3 = jax.random.split(key, 4)

    # Deterministic parameters matching nn.Module __init__ defaults.
    weight0 = jnp.float32(1.0)
    weight1 = jnp.float32(1.0)

    # Case 1: lane-aligned loss maps, forced through the Pallas path
    # (2048 elements -> rows=16 -> 2 row tiles on the parallel grid axis).
    x0 = jax.random.normal(k0, (2, 4, 16, 16), dtype=jnp.float32)
    x1 = jax.random.normal(k1, (2, 4, 16, 16), dtype=jnp.float32)
    l0, l1 = weighted_multi_loss(x0, x1, weight0, weight1, force_pallas=True)
    jax.block_until_ready((l0, l1))
    r0, r1 = _reference(x0, x1, weight0, weight1)
    assert l0.shape == x0.shape and l1.shape == x1.shape
    assert jnp.allclose(l0, r0, atol=1e-6, rtol=1e-6)
    assert jnp.allclose(l1, r1, atol=1e-6, rtol=1e-6)

    # Case 2: ragged shape (not a multiple of 128), forced Pallas -> pad path.
    y0 = jax.random.normal(k2, (3, 50), dtype=jnp.float32)
    y1 = jax.random.normal(k3, (3, 50), dtype=jnp.float32)
    m0, m1 = weighted_multi_loss(y0, y1, weight0, weight1, force_pallas=True)
    jax.block_until_ready((m0, m1))
    s0, s1 = _reference(y0, y1, weight0, weight1)
    assert m0.shape == y0.shape and m1.shape == y1.shape
    assert jnp.allclose(m0, s0, atol=1e-6, rtol=1e-6)
    assert jnp.allclose(m1, s1, atol=1e-6, rtol=1e-6)

    # Case 3: scalar losses (the common real-world case) -> small-size fast path.
    z0 = jnp.float32(0.37)
    z1 = jnp.float32(1.25)
    q0, q1 = weighted_multi_loss(z0, z1, weight0, weight1)
    jax.block_until_ready((q0, q1))
    t0, t1 = _reference(z0, z1, weight0, weight1)
    assert jnp.allclose(q0, t0, atol=1e-6, rtol=1e-6)
    assert jnp.allclose(q1, t1, atol=1e-6, rtol=1e-6)

    print("KERNEL_OK")
</pallas_src>

<mosaic_0001>
module attributes {stable_mosaic.version = 11 : i64} {
  func.func @_wml_kernel(%arg0: i32, %arg1: memref<4xf32, #tpu.memory_space<smem>>, %arg2: memref<8x128xf32, #tpu.memory_space<vmem>>, %arg3: memref<8x128xf32, #tpu.memory_space<vmem>>, %arg4: memref<8x128xf32, #tpu.memory_space<vmem>>, %arg5: memref<8x128xf32, #tpu.memory_space<vmem>>) attributes {dimension_semantics = [#tpu.dimension_semantics<parallel>], iteration_bounds = array<i64: 2>, scalar_prefetch = 1 : i64, scratch_operands = 0 : i64, tpu.core_type = #tpu.core_type<tc>, window_params = [{transform_indices = @transform_0, window_bounds = array<i64: 8, 128>}, {transform_indices = @transform_1, window_bounds = array<i64: 8, 128>}, {transform_indices = @transform_2, window_bounds = array<i64: 8, 128>}, {transform_indices = @transform_3, window_bounds = array<i64: 8, 128>}]} {
    %c0 = arith.constant 0 : index
    %0 = memref.load %arg1[%c0] : memref<4xf32, #tpu.memory_space<smem>>
    %c1 = arith.constant 1 : index
    %1 = memref.load %arg1[%c1] : memref<4xf32, #tpu.memory_space<smem>>
    %c2 = arith.constant 2 : index
    %2 = memref.load %arg1[%c2] : memref<4xf32, #tpu.memory_space<smem>>
    %c3 = arith.constant 3 : index
    %3 = memref.load %arg1[%c3] : memref<4xf32, #tpu.memory_space<smem>>
    %c0_0 = arith.constant 0 : index
    %c0_1 = arith.constant 0 : index
    %4 = vector.load %arg2[%c0_0, %c0_1] : memref<8x128xf32, #tpu.memory_space<vmem>>, vector<8x128xf32>
    %5 = vector.broadcast %1 : f32 to vector<8x128xf32>
    %6 = arith.mulf %4, %5 : vector<8x128xf32>
    %7 = vector.broadcast %0 : f32 to vector<8x128xf32>
    %8 = arith.addf %6, %7 : vector<8x128xf32>
    %c0_2 = arith.constant 0 : index
    %c0_3 = arith.constant 0 : index
    %9 = vector.load %arg4[%c0_2, %c0_3] : memref<8x128xf32, #tpu.memory_space<vmem>>, vector<8x128xf32>
    tpu.vector_store %arg4[%c0_2, %c0_3], %8 {strides = array<i32>} : memref<8x128xf32, #tpu.memory_space<vmem>>, vector<8x128xf32>,
    %c0_4 = arith.constant 0 : index
    %c0_5 = arith.constant 0 : index
    %10 = vector.load %arg3[%c0_4, %c0_5] : memref<8x128xf32, #tpu.memory_space<vmem>>, vector<8x128xf32>
    %11 = vector.broadcast %3 : f32 to vector<8x128xf32>
    %12 = arith.mulf %10, %11 : vector<8x128xf32>
    %13 = vector.broadcast %2 : f32 to vector<8x128xf32>
    %14 = arith.addf %12, %13 : vector<8x128xf32>
    %c0_6 = arith.constant 0 : index
    %c0_7 = arith.constant 0 : index
    %15 = vector.load %arg5[%c0_6, %c0_7] : memref<8x128xf32, #tpu.memory_space<vmem>>, vector<8x128xf32>
    tpu.vector_store %arg5[%c0_6, %c0_7], %14 {strides = array<i32>} : memref<8x128xf32, #tpu.memory_space<vmem>>, vector<8x128xf32>,
    return
  }
  func.func @transform_0(%arg0: i32, %arg1: memref<4xf32, #tpu.memory_space<smem>>) -> (i32, i32) {
    %c0_i32 = arith.constant 0 : i32
    %c0_i32_0 = arith.constant 0 : i32
    return %arg0, %c0_i32 : i32, i32
  }
  func.func @transform_1(%arg0: i32, %arg1: memref<4xf32, #tpu.memory_space<smem>>) -> (i32, i32) {
    %c0_i32 = arith.constant 0 : i32
    %c0_i32_0 = arith.constant 0 : i32
    return %arg0, %c0_i32 : i32, i32
  }
  func.func @transform_2(%arg0: i32, %arg1: memref<4xf32, #tpu.memory_space<smem>>) -> (i32, i32) {
    %c0_i32 = arith.constant 0 : i32
    %c0_i32_0 = arith.constant 0 : i32
    return %arg0, %c0_i32 : i32, i32
  }
  func.func @transform_3(%arg0: i32, %arg1: memref<4xf32, #tpu.memory_space<smem>>) -> (i32, i32) {
    %c0_i32 = arith.constant 0 : i32
    %c0_i32_0 = arith.constant 0 : i32
    return %arg0, %c0_i32 : i32, i32
  }
}

</mosaic_0001>

<llo_original>
// kernel: tpu_custom_call.1
$region0: #{tpu_custom_call.1}
  #allocation0 [shape = 'u32[]', space=smem, size = 0x4, offset = 0x4, fixed_abs, tag = 'smem constant byte address 0x4 - core index']
  #allocation1 [shape = 'u32[72,128]{1,0:T(1,128)}', space=vmem, size = 0x9000, scoped, tag = 'internal scratch']
  #allocation2 [shape = 's32[1]{0}', space=sflag, size = 0x4, scoped, tag = 'scoped memory for tpu_custom_call.1']
  #allocation3 [shape = 'u8[512]{0}', space=smem, size = 0x200, scoped, tag = 'prefetched SMEM operand 0']
  %s0 = inlined_call_operand.hbm [shape: f32[4], index: 0, kind: input, shape index: {}]
  %s1 = inlined_call_operand.hbm [shape: f32[16,128], index: 1, kind: input, shape index: {}]
  %s2 = inlined_call_operand.hbm [shape: f32[16,128], index: 2, kind: input, shape index: {}]
  %s3 = inlined_call_operand.hbm [shape: f32[16,128], index: 3, kind: output, shape index: {0}]
  %s4 = inlined_call_operand.hbm [shape: f32[16,128], index: 4, kind: output, shape index: {1}]
  %5 = xla_tuple %s3, %s4
  %s6 = sld [smem:[#allocation0]]
  $region57: #{tpu_custom_call.1} parent=0
    _
  %s8 = ssub.s32 1, %s6
  %s9 = scalar_select 0, %s8, %s6
  %s11 = sshll.u32 %s0, 4
  %s12 = int_to_ptr.hbm [resolvable:$true] %s11
  %14 = dma.hbm_to_smem %s12, 16, [#allocation3], [#allocation2]
  %16 = dma.done [#allocation2], 16
  %17 = sfence
  $region1: #{tpu_custom_call.1} parent=0
    #allocation4 [shape = 'u8[8192]{0}', space=vmem, size = 0x2000, scoped, tag = 'input window, operand 1']
    #allocation5 [shape = 's32[2]{0}', space=sflag, size = 0x8, scoped, tag = 'scoped memory for tpu_custom_call.1']
    #allocation6 [shape = 's32[2]{0}', space=sflag, size = 0x8, scoped, tag = 'scoped memory for tpu_custom_call.1']
    #allocation7 [shape = 'u8[8192]{0}', space=vmem, size = 0x2000, scoped, tag = 'input window, operand 2']
    #allocation8 [shape = 's32[2]{0}', space=sflag, size = 0x8, scoped, tag = 'scoped memory for tpu_custom_call.1']
    #allocation9 [shape = 'u8[8192]{0}', space=vmem, size = 0x2000, scoped, tag = 'output window, operand 0']
    #allocation10 [shape = 'u8[8192]{0}', space=vmem, size = 0x2000, scoped, tag = 'output window, operand 1']
    #allocation11 [shape = 's32[2]{0}', space=sflag, size = 0x8, scoped, tag = 'scoped memory for tpu_custom_call.1']
    %18 = vsyncpa [#allocation5], 0
    %s19 = scalar_lea.sflag [#allocation5], 1
    %20 = vsyncpa %s19, 0
    %21 = vsyncpa [#allocation8], 0
    %s22 = scalar_lea.sflag [#allocation8], 1
    %23 = vsyncpa %s22, 0
    %24 = vsyncpa [#allocation6], 0
    %s25 = scalar_lea.sflag [#allocation6], 1
    %26 = vsyncpa %s25, 0
    %27 = vsyncpa [#allocation11], 0
    %s28 = scalar_lea.sflag [#allocation11], 1
    %29 = vsyncpa %s28, 0
    loop: start=0, step=1, limit=4
    $region2: #{tpu_custom_call.1} parent=1 // loop_pre_header
      _
    $region3: #{tpu_custom_call.1} parent=1 // loop_header
      %s31 = sphi 0, %s35
      %p32 = scmp.ge.s32.totalorder %s31, 4
      %s41 = sphi 0, %s43
      %s44 = sphi 0, %s41
      %s45 = sphi 0, %s44
      %s61 = sphi 0, %s45
      %s67 = sphi 0, %s69
      %s70 = sphi 0, %s67
      %s71 = sphi 0, %s70
      %s87 = sphi 0, %s71
      %s93 = sphi 0, %s95
      %s96 = sphi 0, %s93
      %s97 = sphi 0, %s96
      %s113 = sphi 0, %s97
      %s119 = sphi 0, %s121
      %s122 = sphi 0, %s119
      %s123 = sphi 0, %s122
      %s139 = sphi 0, %s123
    $region4: #{tpu_custom_call.1} parent=1 // loop_header_branch
      %34 = sbr.rel (%p32) target = $region8
    $region5: #{tpu_custom_call.1} parent=1 // loop_body
      %s36 = ssub.s32 %s31, 1
      %s37 = ssub.s32 %s31, 2
      %s38 = sadd.s32 %s31, 1
      %s39 = ssub.s32 %s31, %s38
      %p40 = scmp.eq.s32.totalorder %s39, 0
      %s42 = sadd.s32 %s41, 1
      %s43 = scalar_select %p40, %s41, %s42
      %p46 = pneg %p40
      %p47 = scmp.eq.s32.totalorder %s31, 1
      %p48 = por %p46, %p47
      %p49 = scmp.ne.s32.totalorder %s41, %s44
      %p50 = scmp.eq.s32.totalorder %s31, 0
      %p51 = por %p49, %p50
      %p52 = scmp.ne.s32.totalorder %s41, %s44
      %p53 = scmp.eq.s32.totalorder %s36, 1
      %p54 = por %p52, %p53
      %p55 = scmp.ne.s32.totalorder %s44, %s45
      %p56 = scmp.eq.s32.totalorder %s36, 0
      %p57 = por %p55, %p56
      %p58 = scmp.ne.s32.totalorder %s44, %s45
      %p59 = scmp.eq.s32.totalorder %s37, 1
      %p60 = por %p58, %p59
      %p62 = scmp.ne.s32.totalorder %s45, %s61
      %p63 = scmp.eq.s32.totalorder %s37, 0
      %p64 = por %p62, %p63
      %s65 = ssub.s32 %s31, %s38
      %p66 = scmp.eq.s32.totalorder %s65, 0
      %s68 = sadd.s32 %s67, 1
      %s69 = scalar_select %p66, %s67, %s68
      %p72 = pneg %p66
      %p73 = scmp.eq.s32.totalorder %s31, 1
      %p74 = por %p72, %p73
      %p75 = scmp.ne.s32.totalorder %s67, %s70
      %p76 = scmp.eq.s32.totalorder %s31, 0
      %p77 = por %p75, %p76
      %p78 = scmp.ne.s32.totalorder %s67, %s70
      %p79 = scmp.eq.s32.totalorder %s36, 1
      %p80 = por %p78, %p79
      %p81 = scmp.ne.s32.totalorder %s70, %s71
      %p82 = scmp.eq.s32.totalorder %s36, 0
      %p83 = por %p81, %p82
      %p84 = scmp.ne.s32.totalorder %s70, %s71
      %p85 = scmp.eq.s32.totalorder %s37, 1
      %p86 = por %p84, %p85
      %p88 = scmp.ne.s32.totalorder %s71, %s87
      %p89 = scmp.eq.s32.totalorder %s37, 0
      %p90 = por %p88, %p89
      %s91 = ssub.s32 %s31, %s38
      %p92 = scmp.eq.s32.totalorder %s91, 0
      %s94 = sadd.s32 %s93, 1
      %s95 = scalar_select %p92, %s93, %s94
      %p98 = pneg %p92
      %p99 = scmp.eq.s32.totalorder %s31, 1
      %p100 = por %p98, %p99
      %p101 = scmp.ne.s32.totalorder %s93, %s96
      %p102 = scmp.eq.s32.totalorder %s31, 0
      %p103 = por %p101, %p102
      %p104 = scmp.ne.s32.totalorder %s93, %s96
      %p105 = scmp.eq.s32.totalorder %s36, 1
      %p106 = por %p104, %p105
      %p107 = scmp.ne.s32.totalorder %s96, %s97
      %p108 = scmp.eq.s32.totalorder %s36, 0
      %p109 = por %p107, %p108
      %p110 = scmp.ne.s32.totalorder %s96, %s97
      %p111 = scmp.eq.s32.totalorder %s37, 1
      %p112 = por %p110, %p111
      %p114 = scmp.ne.s32.totalorder %s97, %s113
      %p115 = scmp.eq.s32.totalorder %s37, 0
      %p116 = por %p114, %p115
      %s117 = ssub.s32 %s31, %s38
      %p118 = scmp.eq.s32.totalorder %s117, 0
      %s120 = sadd.s32 %s119, 1
      %s121 = scalar_select %p118, %s119, %s120
      %p124 = pneg %p118
      %p125 = scmp.eq.s32.totalorder %s31, 1
      %p126 = por %p124, %p125
      %p127 = scmp.ne.s32.totalorder %s119, %s122
      %p128 = scmp.eq.s32.totalorder %s31, 0
      %p129 = por %p127, %p128
      %p130 = scmp.ne.s32.totalorder %s119, %s122
      %p131 = scmp.eq.s32.totalorder %s36, 1
      %p132 = por %p130, %p131
      %p133 = scmp.ne.s32.totalorder %s122, %s123
      %p134 = scmp.eq.s32.totalorder %s36, 0
      %p135 = por %p133, %p134
      %p136 = scmp.ne.s32.totalorder %s122, %s123
      %p137 = scmp.eq.s32.totalorder %s37, 1
      %p138 = por %p136, %p137
      %p140 = scmp.ne.s32.totalorder %s123, %s139
      %p141 = scmp.eq.s32.totalorder %s37, 0
      %p142 = por %p140, %p141
      %p143 = scmp.le.s32.totalorder 1, %s31
      %p144 = scmp.lt.s32.totalorder %s31, 3
      %p145 = pnand %p143, %p144
      %p146 = pneg %p145
      // Predicated region
      $region9: #{tpu_custom_call.1} parent=5 // pred_check
        _
      $region10: #{tpu_custom_call.1} parent=5 // pred_check_branch
        %148 = sbr.rel (%p145) target = $region12
      $region11: #{tpu_custom_call.1} parent=5 // pred_region
        %s149 = ssub.s32 %s31, 1
      $region12: #{tpu_custom_call.1} parent=5 // pred_fallthru
        _
      %p150 = scmp.lt.s32.totalorder %s31, 2
      // Predicated region
      $region13: #{tpu_custom_call.1} parent=5 // pred_check
        %p151 = pneg %p150
      $region14: #{tpu_custom_call.1} parent=5 // pred_check_branch
        %153 = sbr.rel (%p151) target = $region16
      $region15: #{tpu_custom_call.1} parent=5 // pred_region
        // Predicated region
        $region17: #{tpu_custom_call.1} parent=15 // pred_check
          %p154 = pneg %p51
        $region18: #{tpu_custom_call.1} parent=15 // pred_check_branch
          %156 = sbr.rel (%p154) target = $region20
        $region19: #{tpu_custom_call.1} parent=15 // pred_region
          %s157 = sand.u32 %s41, 1
          %s158 = scalar_lea.sflag [#allocation5], %s157
          %s159 = sand.u32 %s41, 1
          %s160 = smul.addr %s159, 8
          %s161 = scalar_lea.vmem [#allocation4], %s160
          %163 = vsyncadd %s158, 0
          %s164 = smul.addr %s31, 8
          %s165 = scalar_lea.hbm %s1, %s164
          %s167 = sshll.u32 %s165, 4
          %s168 = int_to_ptr.hbm [resolvable:$true] %s167
          %s169 = sshll.u32 %s161, 4
          %s170 = int_to_ptr.vmem [resolvable:$true] %s169
          %172 = dma.hbm_to_vmem [thread:$0]  %s168, 128, %s170, %s158
        $region20: #{tpu_custom_call.1} parent=15 // pred_fallthru
          _
        // Predicated region
        $region21: #{tpu_custom_call.1} parent=15 // pred_check
          %p173 = pneg %p77
        $region22: #{tpu_custom_call.1} parent=15 // pred_check_branch
          %175 = sbr.rel (%p173) target = $region24
        $region23: #{tpu_custom_call.1} parent=15 // pred_region
          %s176 = sand.u32 %s67, 1
          %s177 = scalar_lea.sflag [#allocation8], %s176
          %s178 = sand.u32 %s67, 1
          %s179 = smul.addr %s178, 8
          %s180 = scalar_lea.vmem [#allocation7], %s179
          %182 = vsyncadd %s177, 0
          %s183 = smul.addr %s31, 8
          %s184 = scalar_lea.hbm %s2, %s183
          %s186 = sshll.u32 %s184, 4
          %s187 = int_to_ptr.hbm [resolvable:$true] %s186
          %s188 = sshll.u32 %s180, 4
          %s189 = int_to_ptr.vmem [resolvable:$true] %s188
          %191 = dma.hbm_to_vmem [thread:$0]  %s187, 128, %s189, %s177
        $region24: #{tpu_custom_call.1} parent=15 // pred_fallthru
          _
      $region16: #{tpu_custom_call.1} parent=5 // pred_fallthru
        _
      %p192 = scmp.le.s32.totalorder 1, %s31
      %p193 = scmp.lt.s32.totalorder %s31, 3
      %p194 = pnand %p192, %p193
      %p195 = pneg %p194
      // Predicated region
      $region25: #{tpu_custom_call.1} parent=5 // pred_check
        _
      $region26: #{tpu_custom_call.1} parent=5 // pred_check_branch
        %197 = sbr.rel (%p194) target = $region28
      $region27: #{tpu_custom_call.1} parent=5 // pred_region
        %s198 = ssub.s32 %s31, 1
        %s199 = sand.u32 %s44, 1
        %s200 = scalar_lea.sflag [#allocation5], %s199
        %s201 = sand.u32 %s44, 1
        %s202 = smul.addr %s201, 8
        %s203 = scalar_lea.vmem [#allocation4], %s202
        // Predicated region
        $region29: #{tpu_custom_call.1} parent=27 // pred_check
          %p204 = pneg %p57
        $region30: #{tpu_custom_call.1} parent=27 // pred_check_branch
          %206 = sbr.rel (%p204) target = $region32
        $region31: #{tpu_custom_call.1} parent=27 // pred_region
          %208 = dma.done %s200, 128
        $region32: #{tpu_custom_call.1} parent=27 // pred_fallthru
          _
        %s209 = sand.u32 %s70, 1
        %s210 = scalar_lea.sflag [#allocation8], %s209
        %s211 = sand.u32 %s70, 1
        %s212 = smul.addr %s211, 8
        %s213 = scalar_lea.vmem [#allocation7], %s212
        // Predicated region
        $region33: #{tpu_custom_call.1} parent=27 // pred_check
          %p214 = pneg %p83
        $region34: #{tpu_custom_call.1} parent=27 // pred_check_branch
          %216 = sbr.rel (%p214) target = $region36
        $region35: #{tpu_custom_call.1} parent=27 // pred_region
          %218 = dma.done %s210, 128
        $region36: #{tpu_custom_call.1} parent=27 // pred_fallthru
          _
        %s219 = sand.u32 %s44, 1
        %s220 = scalar_lea.sflag [#allocation5], %s219
        %s221 = sand.u32 %s44, 1
        %s222 = smul.addr %s221, 8
        %s223 = scalar_lea.vmem [#allocation4], %s222
        %p224 = pneg %p57
        %p225 = pneg %p54
        %s226 = sand.u32 %s70, 1
        %s227 = scalar_lea.sflag [#allocation8], %s226
        %s228 = sand.u32 %s70, 1
        %s229 = smul.addr %s228, 8
        %s230 = scalar_lea.vmem [#allocation7], %s229
        %p231 = pneg %p83
        %p232 = pneg %p80
        %p233 = pneg %p109
        %p234 = pneg %p106
        %s235 = sand.u32 %s96, 1
        %s236 = scalar_lea.sflag [#allocation6], %s235
        %s237 = sand.u32 %s96, 1
        %s238 = smul.addr %s237, 8
        %s239 = scalar_lea.vmem [#allocation9], %s238
        %p240 = pneg %p135
        %p241 = pneg %p132
        %s242 = sand.u32 %s122, 1
        %s243 = scalar_lea.sflag [#allocation11], %s242
        %s244 = sand.u32 %s122, 1
        %s245 = smul.addr %s244, 8
        %s246 = scalar_lea.vmem [#allocation10], %s245
        %s247 = sld [smem:[#allocation3]]
        %s248 = sld [smem:[#allocation3 + $0x1]]
        %s249 = sld [smem:[#allocation3 + $0x2]]
        %s250 = sld [smem:[#allocation3 + $0x3]]
        %v251 = vld [vmem:[%s203] sm:$0xff]
        %v252 = vstv %s248
        %v253 = vmul.f32 %v251, %v252
        %v254 = vstv %s247
        %v255 = vadd.f32 %v253, %v254
        %256 = vst [vmem:[%s239] sm:$0xff] %v255
        %v257 = vld [vmem:[%s213] sm:$0xff]
        %v258 = vstv %s250
        %v259 = vmul.f32 %v257, %v258
        %v260 = vstv %s249
        %v261 = vadd.f32 %v259, %v260
        %262 = vst [vmem:[%s246] sm:$0xff] %v261
        %s263 = sand.u32 %s96, 1
        %s264 = scalar_lea.sflag [#allocation6], %s263
        %s265 = sand.u32 %s96, 1
        %s266 = smul.addr %s265, 8
        %s267 = scalar_lea.vmem [#allocation9], %s266
        %s268 = sand.u32 %s122, 1
        %s269 = scalar_lea.sflag [#allocation11], %s268
        %s270 = sand.u32 %s122, 1
        %s271 = smul.addr %s270, 8
        %s272 = scalar_lea.vmem [#allocation10], %s271
        // Predicated region
        $region37: #{tpu_custom_call.1} parent=27 // pred_check
          %p273 = pneg %p106
        $region38: #{tpu_custom_call.1} parent=27 // pred_check_branch
          %275 = sbr.rel (%p273) target = $region40
        $region39: #{tpu_custom_call.1} parent=27 // pred_region
          %277 = vsyncadd %s264, 0
          %s278 = smul.addr %s36, 8
          %s279 = scalar_lea.hbm %s3, %s278
          %s281 = sshll.u32 %s267, 4
          %s282 = int_to_ptr.vmem [resolvable:$true] %s281
          %s283 = sshll.u32 %s279, 4
          %s284 = int_to_ptr.hbm [resolvable:$true] %s283
          %286 = dma.vmem_to_hbm [thread:$0]  %s282, 128, %s284, %s264
        $region40: #{tpu_custom_call.1} parent=27 // pred_fallthru
          _
        // Predicated region
        $region41: #{tpu_custom_call.1} parent=27 // pred_check
          %p287 = pneg %p132
        $region42: #{tpu_custom_call.1} parent=27 // pred_check_branch
          %289 = sbr.rel (%p287) target = $region44
        $region43: #{tpu_custom_call.1} parent=27 // pred_region
          %291 = vsyncadd %s269, 0
          %s292 = smul.addr %s36, 8
          %s293 = scalar_lea.hbm %s4, %s292
          %s295 = sshll.u32 %s272, 4
          %s296 = int_to_ptr.vmem [resolvable:$true] %s295
          %s297 = sshll.u32 %s293, 4
          %s298 = int_to_ptr.hbm [resolvable:$true] %s297
          %300 = dma.vmem_to_hbm [thread:$0]  %s296, 128, %s298, %s269
        $region44: #{tpu_custom_call.1} parent=27 // pred_fallthru
          _
      $region28: #{tpu_custom_call.1} parent=5 // pred_fallthru
        _
      %p301 = scmp.le.s32.totalorder 2, %s31
      // Predicated region
      $region45: #{tpu_custom_call.1} parent=5 // pred_check
        %p302 = pneg %p301
      $region46: #{tpu_custom_call.1} parent=5 // pred_check_branch
        %304 = sbr.rel (%p302) target = $region48
      $region47: #{tpu_custom_call.1} parent=5 // pred_region
        %s305 = ssub.s32 %s31, 2
        // Predicated region
        $region49: #{tpu_custom_call.1} parent=47 // pred_check
          %p306 = pneg %p112
        $region50: #{tpu_custom_call.1} parent=47 // pred_check_branch
          %308 = sbr.rel (%p306) target = $region52
        $region51: #{tpu_custom_call.1} parent=47 // pred_region
          %s309 = sand.u32 %s97, 1
          %s310 = scalar_lea.sflag [#allocation6], %s309
          %s311 = sand.u32 %s97, 1
          %s312 = smul.addr %s311, 8
          %s313 = scalar_lea.vmem [#allocation9], %s312
          %315 = dma.done %s310, 128
        $region52: #{tpu_custom_call.1} parent=47 // pred_fallthru
          _
        // Predicated region
        $region53: #{tpu_custom_call.1} parent=47 // pred_check
          %p316 = pneg %p138
        $region54: #{tpu_custom_call.1} parent=47 // pred_check_branch
          %318 = sbr.rel (%p316) target = $region56
        $region55: #{tpu_custom_call.1} parent=47 // pred_region
          %s319 = sand.u32 %s123, 1
          %s320 = scalar_lea.sflag [#allocation11], %s319
          %s321 = sand.u32 %s123, 1
          %s322 = smul.addr %s321, 8
          %s323 = scalar_lea.vmem [#allocation10], %s322
          %325 = dma.done %s320, 128
        $region56: #{tpu_custom_call.1} parent=47 // pred_fallthru
          _
      $region48: #{tpu_custom_call.1} parent=5 // pred_fallthru
        _
    $region6: #{tpu_custom_call.1} parent=1 // loop_footer
      %s35 = sadd.s32 1, %s31
    $region7: #{tpu_custom_call.1} parent=1 // loop_footer_branch
      %30 = sbr.rel target = $region3
    $region8: #{tpu_custom_call.1} parent=1 // loop_exit
      _
    %326 = vsyncpa [#allocation5], 1
    %s327 = scalar_lea.sflag [#allocation5], 1
    %328 = vsyncpa %s327, 1
    %329 = vsyncpa [#allocation8], 1
    %s330 = scalar_lea.sflag [#allocation8], 1
    %331 = vsyncpa %s330, 1
    %332 = vsyncpa [#allocation6], 1
    %s333 = scalar_lea.sflag [#allocation6], 1
    %334 = vsyncpa %s333, 1
    %335 = vsyncpa [#allocation11], 1
    %s336 = scalar_lea.sflag [#allocation11], 1
    %337 = vsyncpa %s336, 1

</llo_original>
